<compile_context>
chip_gen: v6e
topology: v6e:2x2x1
jax: 0.10.0
libtpu: 0.0.40
codegen_flags: <defaults>
</compile_context>

<pallas_src>
import functools

import jax
import jax.numpy as jnp
from jax.experimental import pallas as pl
from jax.experimental.pallas import tpu as pltpu

BN_EPS = 1e-5
_SUB = 8                       # f32 sublanes per vreg
_LANE = 128                    # lanes per vreg
_TILE_COLS_TARGET = 16 * 1024  # (8, 16384) f32 = 512 KiB per input block
_VMEM_LIMIT = 32 * 1024 * 1024  # explicit scoped-VMEM budget (<= v7x physical)


def _actor_mixture(x, params_ref):
    """Fused a0*x + a1*relu(x) + a2*hardswish(x) + a3*prelu(x).

    Identity / ReLU / PReLU collapse to a single compare+select slope; the
    hardswish weight/6 is folded into one coefficient.  All coefficients are
    folded once from SMEM scalars (scalar ALU, free).
    """
    a_id = params_ref[0]
    a_relu = params_ref[1]
    a_hsw = params_ref[2]
    a_prelu = params_ref[3]
    prelu_a = params_ref[4]

    pos_slope = a_id + a_relu + a_prelu        # slope where x >= 0
    neg_slope = a_id + a_prelu * prelu_a       # slope where x <  0
    hsw_coef = a_hsw * (1.0 / 6.0)

    slope = jnp.where(x >= 0.0, pos_slope, neg_slope)
    return x * slope + (hsw_coef * x) * jnp.clip(x + 3.0, 0.0, 6.0)


def _stats_kernel(params_ref, x_ref, stats_ref, acc_s, acc_q, *, inv_n):
    """Phase 1: accumulate sum / sumsq of the actor mixture over all tiles."""
    j = pl.program_id(0)

    @pl.when(j == 0)
    def _():
        acc_s[...] = jnp.zeros_like(acc_s)
        acc_q[...] = jnp.zeros_like(acc_q)

    y = _actor_mixture(x_ref[...], params_ref)
    acc_s[...] += y          # pure VPU elementwise adds; XLU reduce deferred
    acc_q[...] += y * y

    @pl.when(j == pl.num_programs(0) - 1)
    def _():
        s = jnp.sum(acc_s[...])          # single cross-lane/sublane reduce
        q = jnp.sum(acc_q[...])
        mean = s * inv_n                 # inv_n static -> multiply, no divide
        var = q * inv_n - mean * mean    # biased variance (BN training mode)
        inv_std = jax.lax.rsqrt(var + BN_EPS)   # EUP slot
        gamma = params_ref[5]
        beta = params_ref[6]
        scale = inv_std * gamma
        shift = beta - mean * scale
        stats_ref[0] = scale
        stats_ref[1] = shift


def _normalize_kernel(params_ref, stats_ref, x_ref, o_ref):
    """Phase 2: recompute the cheap activation and apply y*scale + shift."""
    y = _actor_mixture(x_ref[...], params_ref)
    o_ref[...] = y * stats_ref[0] + stats_ref[1]


def repact_bn(x, actor_atn, prelu_weight, bn_gamma, bn_beta):
    """x: any-rank float32 tensor (e.g. NCHW). Returns the same shape."""
    orig_shape = x.shape
    total = 1
    for d in orig_shape:
        total *= int(d)

    # Merge all scalar params into one SMEM operand:
    # [atn0, atn1, atn2, atn3, prelu_a, bn_gamma, bn_beta]
    params = jnp.concatenate([
        actor_atn.astype(jnp.float32).reshape(4),
        prelu_weight.astype(jnp.float32).reshape(1),
        bn_gamma.astype(jnp.float32).reshape(1),
        bn_beta.astype(jnp.float32).reshape(1),
    ])

    # Full-sublane (8), lane-dense slab; columns padded to a multiple of the
    # tile width so every block is (8, tile_cols) with tile_cols % 128 == 0.
    cols_needed = -(-total // _SUB)
    cols_min = -(-cols_needed // _LANE) * _LANE
    tile_cols = min(_TILE_COLS_TARGET, cols_min)
    cols = -(-cols_min // tile_cols) * tile_cols
    padded_total = _SUB * cols
    grid = (cols // tile_cols,)

    x_flat = x.astype(jnp.float32).reshape(-1)
    if padded_total != total:
        # Zero pad: every actor maps 0 -> 0, so padding never perturbs the
        # statistics; 1/n below uses the unpadded count.
        x_flat = jnp.pad(x_flat, (0, padded_total - total))
    x2d = x_flat.reshape(_SUB, cols)

    smem_spec = pl.BlockSpec(memory_space=pltpu.MemorySpace.SMEM)
    x_spec = pl.BlockSpec((_SUB, tile_cols), lambda j: (0, j))

    inv_n = 1.0 / float(total)

    # ---- Phase 1: global sum / sumsq -> (scale, shift) in SMEM ----
    stats = pl.pallas_call(
        functools.partial(_stats_kernel, inv_n=inv_n),
        out_shape=jax.ShapeDtypeStruct((2,), jnp.float32),
        grid=grid,
        in_specs=[smem_spec, x_spec],
        out_specs=smem_spec,
        scratch_shapes=[
            pltpu.VMEM((_SUB, tile_cols), jnp.float32),   # sum accumulator
            pltpu.VMEM((_SUB, tile_cols), jnp.float32),   # sumsq accumulator
        ],
        compiler_params=pltpu.CompilerParams(
            dimension_semantics=("arbitrary",),           # reduction axis
            vmem_limit_bytes=_VMEM_LIMIT),
    )(params, x2d)

    # ---- Phase 2: recompute activation, normalize, store (lane-dense) ----
    out2d = pl.pallas_call(
        _normalize_kernel,
        out_shape=jax.ShapeDtypeStruct((_SUB, cols), jnp.float32),
        grid=grid,
        in_specs=[smem_spec, smem_spec, x_spec],
        out_specs=pl.BlockSpec((_SUB, tile_cols), lambda j: (0, j)),
        compiler_params=pltpu.CompilerParams(
            dimension_semantics=("parallel",),            # shard across TCs
            vmem_limit_bytes=_VMEM_LIMIT),
    )(params, stats, x2d)

    out_flat = out2d.reshape(-1)
    if padded_total != total:
        out_flat = out_flat[:total]
    return out_flat.reshape(orig_shape)


def repact_bn_reference(x, actor_atn, prelu_weight, bn_gamma, bn_beta):
    """Pure-JAX reference mirroring the PyTorch forward (training-mode BN)."""
    a = actor_atn
    relu = jnp.maximum(x, 0.0)
    hardswish = x * jnp.clip(x + 3.0, 0.0, 6.0) / 6.0
    prelu = jnp.where(x >= 0.0, x, prelu_weight[0] * x)
    y = x * a[0] + relu * a[1] + hardswish * a[2] + prelu * a[3]
    mean = jnp.mean(y)
    var = jnp.mean((y - mean) ** 2)
    return (y - mean) / jnp.sqrt(var + BN_EPS) * bn_gamma[0] + bn_beta[0]


if __name__ == "__main__":
    key = jax.random.PRNGKey(0)
    bs, c, h, w = 2, 4, 16, 16
    x = jax.random.normal(key, (bs, c, h, w), dtype=jnp.float32)

    # Deterministic parameter init (matches PyTorch __init__ defaults):
    actor_atn = jnp.full((4,), 0.25, dtype=jnp.float32)   # zeros + 1/ActorNum
    prelu_weight = jnp.array([0.25], dtype=jnp.float32)   # nn.PReLU default
    bn_gamma = jnp.array([1.0], dtype=jnp.float32)        # BatchNorm2d weight
    bn_beta = jnp.array([0.0], dtype=jnp.float32)         # BatchNorm2d bias

    out = repact_bn(x, actor_atn, prelu_weight, bn_gamma, bn_beta)
    out = jax.block_until_ready(out)

    ref = repact_bn_reference(x, actor_atn, prelu_weight, bn_gamma, bn_beta)
    assert out.shape == (bs, c, h, w)
    assert jnp.allclose(out, ref, atol=1e-5, rtol=1e-5), "mismatch vs reference"

    print("KERNEL_OK")
</pallas_src>

<mosaic_0001>
module attributes {stable_mosaic.version = 11 : i64} {
  func.func @_stats_kernel(%arg0: i32, %arg1: memref<7xf32, #tpu.memory_space<smem>>, %arg2: memref<8x256xf32, #tpu.memory_space<vmem>>, %arg3: memref<2xf32, #tpu.memory_space<smem>>, %arg4: memref<8x256xf32, #tpu.memory_space<vmem>>, %arg5: memref<8x256xf32, #tpu.memory_space<vmem>>) attributes {dimension_semantics = [#tpu.dimension_semantics<arbitrary>], iteration_bounds = array<i64: 1>, scalar_prefetch = 0 : i64, scratch_operands = 2 : i64, tpu.core_type = #tpu.core_type<tc>, window_params = [{transform_indices = @transform_0, window_bounds = array<i64: 7>}, {transform_indices = @transform_1, window_bounds = array<i64: 8, 256>}, {transform_indices = @transform_2, window_bounds = array<i64: 2>}]} {
    %c0_i32 = arith.constant 0 : i32
    %0 = arith.cmpi eq, %arg0, %c0_i32 : i32
    %1 = arith.extui %0 : i1 to i32
    %c0_i32_0 = arith.constant 0 : i32
    %2 = arith.cmpi ne, %1, %c0_i32_0 : i32
    scf.if %2 {
      %cst_17 = arith.constant 0.000000e+00 : f32
      %40 = vector.broadcast %cst_17 : f32 to vector<8x256xf32>
      %c0_18 = arith.constant 0 : index
      %c0_19 = arith.constant 0 : index
      %41 = vector.load %arg4[%c0_18, %c0_19] : memref<8x256xf32, #tpu.memory_space<vmem>>, vector<8x256xf32>
      tpu.vector_store %arg4[%c0_18, %c0_19], %40 {strides = array<i32>} : memref<8x256xf32, #tpu.memory_space<vmem>>, vector<8x256xf32>,
      %cst_20 = arith.constant 0.000000e+00 : f32
      %42 = vector.broadcast %cst_20 : f32 to vector<8x256xf32>
      %c0_21 = arith.constant 0 : index
      %c0_22 = arith.constant 0 : index
      %43 = vector.load %arg5[%c0_21, %c0_22] : memref<8x256xf32, #tpu.memory_space<vmem>>, vector<8x256xf32>
      tpu.vector_store %arg5[%c0_21, %c0_22], %42 {strides = array<i32>} : memref<8x256xf32, #tpu.memory_space<vmem>>, vector<8x256xf32>,
    } else {
    }
    %c0 = arith.constant 0 : index
    %c0_1 = arith.constant 0 : index
    %3 = vector.load %arg2[%c0, %c0_1] : memref<8x256xf32, #tpu.memory_space<vmem>>, vector<8x256xf32>
    %c0_2 = arith.constant 0 : index
    %4 = memref.load %arg1[%c0_2] : memref<7xf32, #tpu.memory_space<smem>>
    %c1 = arith.constant 1 : index
    %5 = memref.load %arg1[%c1] : memref<7xf32, #tpu.memory_space<smem>>
    %c2 = arith.constant 2 : index
    %6 = memref.load %arg1[%c2] : memref<7xf32, #tpu.memory_space<smem>>
    %c3 = arith.constant 3 : index
    %7 = memref.load %arg1[%c3] : memref<7xf32, #tpu.memory_space<smem>>
    %c4 = arith.constant 4 : index
    %8 = memref.load %arg1[%c4] : memref<7xf32, #tpu.memory_space<smem>>
    %9 = arith.addf %4, %5 : f32
    %10 = arith.addf %9, %7 : f32
    %11 = arith.mulf %7, %8 : f32
    %12 = arith.addf %4, %11 : f32
    %cst = arith.constant 0.166666672 : f32
    %13 = arith.mulf %6, %cst : f32
    %cst_3 = arith.constant 0.000000e+00 : f32
    %14 = vector.broadcast %cst_3 : f32 to vector<8x256xf32>
    %15 = arith.cmpf oge, %3, %14 : vector<8x256xf32>
    %16 = vector.broadcast %10 : f32 to vector<8x256xf32>
    %17 = vector.broadcast %12 : f32 to vector<8x256xf32>
    %18 = arith.select %15, %16, %17 : vector<8x256xi1>, vector<8x256xf32>
    %19 = arith.mulf %3, %18 : vector<8x256xf32>
    %20 = vector.broadcast %13 : f32 to vector<8x256xf32>
    %21 = arith.mulf %20, %3 : vector<8x256xf32>
    %cst_4 = arith.constant 3.000000e+00 : f32
    %22 = vector.broadcast %cst_4 : f32 to vector<8x256xf32>
    %23 = arith.addf %3, %22 : vector<8x256xf32>
    %cst_5 = arith.constant 0.000000e+00 : f32
    %cst_6 = arith.constant 6.000000e+00 : f32
    %24 = vector.broadcast %cst_5 : f32 to vector<8x256xf32>
    %25 = arith.maximumf %24, %23 : vector<8x256xf32>
    %26 = vector.broadcast %cst_6 : f32 to vector<8x256xf32>
    %27 = arith.minimumf %26, %25 : vector<8x256xf32>
    %28 = arith.mulf %21, %27 : vector<8x256xf32>
    %29 = arith.addf %19, %28 : vector<8x256xf32>
    %c0_7 = arith.constant 0 : index
    %c0_8 = arith.constant 0 : index
    %30 = vector.load %arg4[%c0_7, %c0_8] : memref<8x256xf32, #tpu.memory_space<vmem>>, vector<8x256xf32>
    %31 = arith.addf %30, %29 : vector<8x256xf32>
    %c0_9 = arith.constant 0 : index
    %c0_10 = arith.constant 0 : index
    %32 = vector.load %arg4[%c0_9, %c0_10] : memref<8x256xf32, #tpu.memory_space<vmem>>, vector<8x256xf32>
    tpu.vector_store %arg4[%c0_9, %c0_10], %31 {strides = array<i32>} : memref<8x256xf32, #tpu.memory_space<vmem>>, vector<8x256xf32>,
    %c0_11 = arith.constant 0 : index
    %c0_12 = arith.constant 0 : index
    %33 = vector.load %arg5[%c0_11, %c0_12] : memref<8x256xf32, #tpu.memory_space<vmem>>, vector<8x256xf32>
    %34 = arith.mulf %29, %29 : vector<8x256xf32>
    %35 = arith.addf %33, %34 : vector<8x256xf32>
    %c0_13 = arith.constant 0 : index
    %c0_14 = arith.constant 0 : index
    %36 = vector.load %arg5[%c0_13, %c0_14] : memref<8x256xf32, #tpu.memory_space<vmem>>, vector<8x256xf32>
    tpu.vector_store %arg5[%c0_13, %c0_14], %35 {strides = array<i32>} : memref<8x256xf32, #tpu.memory_space<vmem>>, vector<8x256xf32>,
    %c0_i32_15 = arith.constant 0 : i32
    %37 = arith.cmpi eq, %arg0, %c0_i32_15 : i32
    %38 = arith.extui %37 : i1 to i32
    %c0_i32_16 = arith.constant 0 : i32
    %39 = arith.cmpi ne, %38, %c0_i32_16 : i32
    scf.if %39 {
      %c0_17 = arith.constant 0 : index
      %c0_18 = arith.constant 0 : index
      %40 = vector.load %arg4[%c0_17, %c0_18] : memref<8x256xf32, #tpu.memory_space<vmem>>, vector<8x256xf32>
      %41 = vector.shape_cast %40 : vector<8x256xf32> to vector<1x8x256xf32>
      %cst_19 = arith.constant dense<0.000000e+00> : vector<1xf32>
      %42 = vector.multi_reduction <add>, %41, %cst_19 [1, 2] : vector<1x8x256xf32> to vector<1xf32>
      %43 = vector.shape_cast %42 : vector<1xf32> to vector<1x1x1xf32>
      %44 = vector.extract %43[0, 0, 0] : f32 from vector<1x1x1xf32>
      %c0_20 = arith.constant 0 : index
      %c0_21 = arith.constant 0 : index
      %45 = vector.load %arg5[%c0_20, %c0_21] : memref<8x256xf32, #tpu.memory_space<vmem>>, vector<8x256xf32>
      %46 = vector.shape_cast %45 : vector<8x256xf32> to vector<1x8x256xf32>
      %cst_22 = arith.constant dense<0.000000e+00> : vector<1xf32>
      %47 = vector.multi_reduction <add>, %46, %cst_22 [1, 2] : vector<1x8x256xf32> to vector<1xf32>
      %48 = vector.shape_cast %47 : vector<1xf32> to vector<1x1x1xf32>
      %49 = vector.extract %48[0, 0, 0] : f32 from vector<1x1x1xf32>
      %cst_23 = arith.constant 4.8828125E-4 : f32
      %50 = arith.mulf %44, %cst_23 : f32
      %cst_24 = arith.constant 4.8828125E-4 : f32
      %51 = arith.mulf %49, %cst_24 : f32
      %52 = arith.mulf %50, %50 : f32
      %53 = arith.subf %51, %52 : f32
      %cst_25 = arith.constant 9.99999974E-6 : f32
      %54 = arith.addf %53, %cst_25 : f32
      %55 = math.rsqrt %54 : f32
      %c5 = arith.constant 5 : index
      %56 = memref.load %arg1[%c5] : memref<7xf32, #tpu.memory_space<smem>>
      %c6 = arith.constant 6 : index
      %57 = memref.load %arg1[%c6] : memref<7xf32, #tpu.memory_space<smem>>
      %58 = arith.mulf %55, %56 : f32
      %59 = arith.mulf %50, %58 : f32
      %60 = arith.subf %57, %59 : f32
      %c0_26 = arith.constant 0 : index
      %61 = memref.load %arg3[%c0_26] : memref<2xf32, #tpu.memory_space<smem>>
      memref.store %58, %arg3[%c0_26] : memref<2xf32, #tpu.memory_space<smem>>
      %c1_27 = arith.constant 1 : index
      %62 = memref.load %arg3[%c1_27] : memref<2xf32, #tpu.memory_space<smem>>
      memref.store %60, %arg3[%c1_27] : memref<2xf32, #tpu.memory_space<smem>>
    } else {
    }
    return
  }
  func.func @transform_0(%arg0: i32) -> i32 {
    %c0_i32 = arith.constant 0 : i32
    %c0_i32_0 = arith.constant 0 : i32
    return %c0_i32 : i32
  }
  func.func @transform_1(%arg0: i32) -> (i32, i32) {
    %c0_i32 = arith.constant 0 : i32
    %c0_i32_0 = arith.constant 0 : i32
    return %c0_i32, %arg0 : i32, i32
  }
  func.func @transform_2(%arg0: i32) -> i32 {
    %c0_i32 = arith.constant 0 : i32
    %c0_i32_0 = arith.constant 0 : i32
    return %c0_i32 : i32
  }
}

</mosaic_0001>

<llo_original>
// kernel: tpu_custom_call.1
$region0: #{tpu_custom_call.1}
  #allocation0 [shape = 'u32[]', space=smem, size = 0x4, offset = 0x4, fixed_abs, tag = 'smem constant byte address 0x4 - core index']
  #allocation1 [shape = 'u32[144,128]{1,0:T(1,128)}', space=vmem, size = 0x12000, scoped, tag = 'internal scratch']
  #allocation2 [shape = 'f32[8,256]{1,0:T(8,128)}', space=vmem, size = 0x2000, scoped, tag = 'scratch operand']
  #allocation3 [shape = 'f32[8,256]{1,0:T(8,128)}', space=vmem, size = 0x2000, scoped, tag = 'scratch operand']
  %s0 = inlined_call_operand.hbm [shape: f32[7], index: 0, kind: input, shape index: {}]
  %s1 = inlined_call_operand.hbm [shape: f32[8,256], index: 1, kind: input, shape index: {}]
  %s2 = inlined_call_operand.hbm [shape: f32[2], index: 2, kind: output, shape index: {}]
  %s3 = sld [smem:[#allocation0]]
  $region34: #{tpu_custom_call.1} parent=0
    _
  %s5 = ssub.s32 1, %s3
  %s6 = scalar_select 0, %s5, %s3
  $region1: #{tpu_custom_call.1} parent=0
    #allocation4 [shape = 'u8[512]{0}', space=smem, size = 0x200, scoped, tag = 'input window, operand 0, single buffered']
    #allocation5 [shape = 's32[1]{0}', space=sflag, size = 0x4, scoped, tag = 'scoped memory for tpu_custom_call.1']
    #allocation6 [shape = 's32[1]{0}', space=sflag, size = 0x4, scoped, tag = 'scoped memory for tpu_custom_call.1']
    #allocation7 [shape = 's32[1]{0}', space=sflag, size = 0x4, scoped, tag = 'scoped memory for tpu_custom_call.1']
    #allocation8 [shape = 'u8[8192]{0}', space=vmem, size = 0x2000, scoped, tag = 'input window, operand 1, single buffered']
    #allocation9 [shape = 'u8[512]{0}', space=smem, size = 0x200, scoped, tag = 'output window, operand 0, single buffered']
    %7 = vsyncpa [#allocation6], 0
    %8 = vsyncpa [#allocation5], 0
    %9 = vsyncpa [#allocation7], 0
    // Predicated region
    $region2: #{tpu_custom_call.1} parent=1 // pred_check
      _
    $region3: #{tpu_custom_call.1} parent=1 // pred_check_branch
      %11 = sbr.rel (0) target = $region5
    $region4: #{tpu_custom_call.1} parent=1 // pred_region
      %s13 = ssub.s32 16, 16
      %14 = vsyncadd [#allocation6], %s13
      %17 = dma.hbm_to_smem %s0, 16, [#allocation4], [#allocation6]
    $region5: #{tpu_custom_call.1} parent=1 // pred_fallthru
      _
    // Predicated region
    $region6: #{tpu_custom_call.1} parent=1 // pred_check
      _
    $region7: #{tpu_custom_call.1} parent=1 // pred_check_branch
      %19 = sbr.rel (0) target = $region9
    $region8: #{tpu_custom_call.1} parent=1 // pred_region
      %s21 = ssub.s32 256, 256
      %22 = vsyncadd [#allocation5], %s21
      %s24 = sshll.u32 [#allocation8], 4
      %s25 = int_to_ptr.vmem [resolvable:$true] %s24
      %27 = dma.hbm_to_vmem [thread:$0]  %s1, 256, %s25, [#allocation5]
    $region9: #{tpu_custom_call.1} parent=1 // pred_fallthru
      _
    // Predicated region
    $region10: #{tpu_custom_call.1} parent=1 // pred_check
      _
    $region11: #{tpu_custom_call.1} parent=1 // pred_check_branch
      %29 = sbr.rel (0) target = $region13
    $region12: #{tpu_custom_call.1} parent=1 // pred_region
      %30 = dma.done [#allocation6], 16
    $region13: #{tpu_custom_call.1} parent=1 // pred_fallthru
      _
    // Predicated region
    $region14: #{tpu_custom_call.1} parent=1 // pred_check
      _
    $region15: #{tpu_custom_call.1} parent=1 // pred_check_branch
      %32 = sbr.rel (0) target = $region17
    $region16: #{tpu_custom_call.1} parent=1 // pred_region
      %33 = dma.done [#allocation5], 256
    $region17: #{tpu_custom_call.1} parent=1 // pred_fallthru
      _
    %34 = sfence
    %p35 = scmp.eq.s32.totalorder 0, 0
    // Predicated region
    $region18: #{tpu_custom_call.1} parent=1 // pred_check
      %p36 = pneg %p35
    $region19: #{tpu_custom_call.1} parent=1 // pred_check_branch
      %38 = sbr.rel (%p36) target = $region21
    $region20: #{tpu_custom_call.1} parent=1 // pred_region
      %39 = vst [vmem:[#allocation2] sm:$0xff] 0.0
      %40 = vst [vmem:[#allocation2 + $0x8] sm:$0xff] 0.0
      %41 = vst [vmem:[#allocation3] sm:$0xff] 0.0
      %42 = vst [vmem:[#allocation3 + $0x8] sm:$0xff] 0.0
    $region21: #{tpu_custom_call.1} parent=1 // pred_fallthru
      _
    %v43 = vld [vmem:[#allocation8] sm:$0xff]
    %v44 = vld [vmem:[#allocation8 + $0x8] sm:$0xff]
    %s45 = sld [smem:[#allocation4]]
    %s46 = sld [smem:[#allocation4 + $0x1]]
    %s47 = sld [smem:[#allocation4 + $0x2]]
    %s48 = sld [smem:[#allocation4 + $0x3]]
    %s49 = sld [smem:[#allocation4 + $0x4]]
    %s50 = sadd.f32 %s45, %s46
    %s51 = sadd.f32 %s50, %s48
    %s52 = smul.f32 %s48, %s49
    %s53 = sadd.f32 %s45, %s52
    %s54 = smul.f32 %s47, 0.16666667
    %vm55 = vcmp.ge.f32.partialorder %v43, 0.0
    %vm56 = vcmp.ge.f32.partialorder %v44, 0.0
    %v57 = vstv %s51
    %v58 = vstv %s53
    %v59 = vsel %vm55, %v57, %v58
    %v60 = vsel %vm56, %v57, %v58
    %v61 = vmul.f32 %v43, %v59
    %v62 = vmul.f32 %v44, %v60
    %v63 = vstv %s54
    %v64 = vmul.f32 %v63, %v43
    %v65 = vmul.f32 %v63, %v44
    %v66 = vadd.f32 %v43, 3.0
    %v67 = vadd.f32 %v44, 3.0
    %v68 = vmax.f32 %v66, 0.0
    %v69 = vmax.f32 %v67, 0.0
    %v70 = vmin.f32 %v68, 6.0
    %v71 = vmin.f32 %v69, 6.0
    %v72 = vmul.f32 %v64, %v70
    %v73 = vmul.f32 %v65, %v71
    %v74 = vadd.f32 %v61, %v72
    %v75 = vadd.f32 %v62, %v73
    %v76 = vld [vmem:[#allocation2] sm:$0xff]
    %v77 = vld [vmem:[#allocation2 + $0x8] sm:$0xff]
    %v78 = vadd.f32 %v76, %v74
    %v79 = vadd.f32 %v77, %v75
    %80 = vst [vmem:[#allocation2] sm:$0xff] %v78
    %81 = vst [vmem:[#allocation2 + $0x8] sm:$0xff] %v79
    %v82 = vld [vmem:[#allocation3] sm:$0xff]
    %v83 = vld [vmem:[#allocation3 + $0x8] sm:$0xff]
    %v84 = vmul.f32 %v74, %v74
    %v85 = vmul.f32 %v75, %v75
    %v86 = vadd.f32 %v82, %v84
    %v87 = vadd.f32 %v83, %v85
    %88 = vst [vmem:[#allocation3] sm:$0xff] %v86
    %89 = vst [vmem:[#allocation3 + $0x8] sm:$0xff] %v87
    // Predicated region
    $region22: #{tpu_custom_call.1} parent=1 // pred_check
      %p90 = pneg %p35
    $region23: #{tpu_custom_call.1} parent=1 // pred_check_branch
      %92 = sbr.rel (%p90) target = $region25
    $region24: #{tpu_custom_call.1} parent=1 // pred_region
      %v93 = vld [vmem:[#allocation2] sm:$0xff]
      %v94 = vld [vmem:[#allocation2 + $0x8] sm:$0xff]
      %v95 = vadd.f32 %v93, %v94
      %96 = vadd.xlane.f32.xlu0 %v95
      %v97 = vpop.xlane.xlu0 %96
      %v98 = vrot.slane %v97, 4
      %v99 = vadd.f32 %v97, %v98
      %v100 = vrot.slane %v99, 2
      %v101 = vadd.f32 %v99, %v100
      %v102 = vrot.slane %v101, 1
      %v103 = vadd.f32 %v101, %v102
      %s104 = vtos %v103
      %v105 = vld [vmem:[#allocation3] sm:$0xff]
      %v106 = vld [vmem:[#allocation3 + $0x8] sm:$0xff]
      %v107 = vadd.f32 %v105, %v106
      %108 = vadd.xlane.f32.xlu0 %v107
      %v109 = vpop.xlane.xlu0 %108
      %v110 = vrot.slane %v109, 4
      %v111 = vadd.f32 %v109, %v110
      %v112 = vrot.slane %v111, 2
      %v113 = vadd.f32 %v111, %v112
      %v114 = vrot.slane %v113, 1
      %v115 = vadd.f32 %v113, %v114
      %s116 = vtos %v115
      %s117 = smul.f32 %s104, 0.00048828125
      %s118 = smul.f32 %s116, 0.00048828125
      %s119 = smul.f32 %s117, %s117
      %s120 = ssub.f32 %s118, %s119
      %s121 = sadd.f32 %s120, 1e-05
      %v122 = vstv %s121
      %v123 = vrsqrt.pop %v122
      %s124 = vtos %v123
      %s125 = sld [smem:[#allocation4 + $0x5]]
      %s126 = sld [smem:[#allocation4 + $0x6]]
      %s127 = smul.f32 %s124, %s125
      %s128 = smul.f32 %s117, %s127
      %s129 = ssub.f32 %s126, %s128
      %s130 = scalar_lea.smem [#allocation9], 0
      %131 = sst [smem:[%s130]] %s127
      %s132 = scalar_lea.smem [#allocation9], 1
      %133 = sst [smem:[%s132]] %s129
    $region25: #{tpu_custom_call.1} parent=1 // pred_fallthru
      _
    // Predicated region
    $region26: #{tpu_custom_call.1} parent=1 // pred_check
      _
    $region27: #{tpu_custom_call.1} parent=1 // pred_check_branch
      %135 = sbr.rel (0) target = $region29
    $region28: #{tpu_custom_call.1} parent=1 // pred_region
      %s137 = ssub.s32 16, 16
      %138 = vsyncadd [#allocation7], %s137
      %141 = dma.smem_to_hbm [#allocation9], 16, %s2, [#allocation7]
    $region29: #{tpu_custom_call.1} parent=1 // pred_fallthru
      _
    // Predicated region
    $region30: #{tpu_custom_call.1} parent=1 // pred_check
      _
    $region31: #{tpu_custom_call.1} parent=1 // pred_check_branch
      %143 = sbr.rel (0) target = $region33
    $region32: #{tpu_custom_call.1} parent=1 // pred_region
      %144 = dma.done [#allocation7], 16
    $region33: #{tpu_custom_call.1} parent=1 // pred_fallthru
      _
    %145 = sfence
    %146 = vsyncpa [#allocation5], 1
    %147 = vsyncpa [#allocation6], 1
    %148 = vsyncpa [#allocation7], 1

</llo_original>
